<compile_context>
chip_gen: v7x
topology: tpu7x:2x2x1
jax: 0.10.0
libtpu: 0.0.40
codegen_flags: <defaults>
</compile_context>

<pallas_src>
import functools
import math

import jax
import jax.numpy as jnp
from jax.experimental import pallas as pl
from jax.experimental.pallas import tpu as pltpu


def _qkv_attention_kernel(q_ref, k_ref, v_ref, o_ref, *, scale_sq):
    """One (head_block, C, T) tile of batch-heads per grid step."""
    q = q_ref[...]                            # (HB, C, T)  input dtype
    k = k_ref[...]                            # (HB, C, S)
    v = v_ref[...]                            # (HB, C, S)

    # Fold both C^-1/4 factors into one multiply on the (smaller) q tile.
    q = q * scale_sq

    # weight[b, t, s] = sum_c q[b, c, t] * k[b, c, s]   (MXU, fp32 accumulate)
    w = jax.lax.dot_general(
        q, k,
        dimension_numbers=(((1,), (1,)), ((0,), (0,))),
        preferred_element_type=jnp.float32)                    # (HB, T, S)

    # Softmax over s in fp32 (matches th.softmax(weight.float(), -1)).
    w = w - jnp.max(w, axis=-1, keepdims=True)
    e = jnp.exp(w)
    p = e * pl.reciprocal(jnp.sum(e, axis=-1, keepdims=True), approx=True)

    # Cast probabilities back to the input dtype before the second MXU pass
    # (matches PyTorch's .type(weight.dtype); keeps the MXU at full rate).
    p = p.astype(v.dtype)

    # a[b, c, t] = sum_s p[b, t, s] * v[b, c, s]
    a = jax.lax.dot_general(
        v, p,
        dimension_numbers=(((2,), (2,)), ((0,), (0,))),
        preferred_element_type=jnp.float32)                    # (HB, C, T)

    o_ref[...] = a.astype(o_ref.dtype)


def _round_up(x, m):
    return -(-x // m) * m


def _pick_head_block(n_heads, ch, length, dtype,
                     max_heads=16, vmem_budget=24 * 1024 * 1024):
    """Largest divisor of n_heads that keeps the per-step VMEM footprint small."""
    itemsize = jnp.dtype(dtype).itemsize
    sublane = max(8, 32 // max(itemsize, 1))        # f32: 8, bf16: 16
    ch_p = _round_up(ch, sublane)
    t_p = _round_up(length, 128)
    # Per head: q/k/v input blocks (double-buffered) + output block
    # (double-buffered) + fp32 scores + exp/temporaries (~3x T*S fp32).
    per_head = 8 * ch_p * t_p * itemsize + 3 * t_p * t_p * 4
    cap = min(max(1, vmem_budget // per_head), max_heads)
    best = 1
    for d in range(1, n_heads + 1):
        if n_heads % d == 0 and d <= cap:
            best = d
    return best


def qkv_attention_pallas(qkv, n_heads, head_block=None):
    """qkv: [N, 3*H*C, T] -> [N, H*C, T]"""
    bs, width, length = qkv.shape
    assert width % (3 * n_heads) == 0
    ch = width // (3 * n_heads)
    scale_sq = 1.0 / math.sqrt(ch)          # (C^-1/4)^2, folded into one multiply

    if head_block is None:
        head_block = _pick_head_block(n_heads, ch, length, qkv.dtype)
    assert n_heads % head_block == 0
    heads_per_grid = n_heads // head_block

    # Free, contiguous view: [N, 3*H*C, T] -> [N*3*H, C, T].  Row index along
    # dim 0 is n*(3*H) + slab*H + h, so each q/k/v slab is picked purely by the
    # index_map below -- no split / copy of qkv in HBM.
    qkv3 = qkv.reshape(bs * 3 * n_heads, ch, length)

    def slab_spec(slab):
        return pl.BlockSpec(
            (head_block, ch, length),
            lambda n, hb, s=slab: ((3 * n + s) * heads_per_grid + hb, 0, 0))

    out_spec = pl.BlockSpec(
        (head_block, ch, length),
        lambda n, hb: (n * heads_per_grid + hb, 0, 0))

    kernel = functools.partial(_qkv_attention_kernel, scale_sq=scale_sq)

    out = pl.pallas_call(
        kernel,
        out_shape=jax.ShapeDtypeStruct((bs * n_heads, ch, length), qkv.dtype),
        grid_spec=pltpu.PrefetchScalarGridSpec(
            num_scalar_prefetch=0,
            grid=(bs, heads_per_grid),
            in_specs=[slab_spec(0), slab_spec(1), slab_spec(2)],
            out_specs=out_spec,
        ),
        compiler_params=pltpu.CompilerParams(
            dimension_semantics=("parallel", "parallel")),
    )(qkv3, qkv3, qkv3)

    # Contiguous reshape, free.
    return out.reshape(bs, n_heads * ch, length)


def qkv_attention_reference(qkv, n_heads):
    """Pure-JAX reference mirroring the PyTorch forward exactly."""
    bs, width, length = qkv.shape
    ch = width // (3 * n_heads)
    q, k, v = jnp.split(qkv, 3, axis=1)
    scale = 1.0 / math.sqrt(math.sqrt(ch))
    q = q.reshape(bs * n_heads, ch, length)
    k = k.reshape(bs * n_heads, ch, length)
    v = v.reshape(bs * n_heads, ch, length)
    weight = jnp.einsum('bct,bcs->bts', q * scale, k * scale)
    weight = jax.nn.softmax(weight.astype(jnp.float32), axis=-1).astype(weight.dtype)
    a = jnp.einsum('bts,bcs->bct', weight, v)
    return a.reshape(bs, -1, length)


if __name__ == "__main__":
    # Small deterministic inputs: N=2, H=4, C=8, T=16  ->  qkv [2, 96, 16]
    n_heads = 4
    N, C, T = 2, 8, 16
    key = jax.random.PRNGKey(0)
    qkv = jax.random.normal(key, (N, 3 * n_heads * C, T), dtype=jnp.float32)

    fn = jax.jit(functools.partial(qkv_attention_pallas, n_heads=n_heads))
    out = jax.block_until_ready(fn(qkv))

    ref = qkv_attention_reference(qkv, n_heads)
    assert out.shape == (N, n_heads * C, T), out.shape
    max_err = float(jnp.max(jnp.abs(out - ref)))
    # Tolerance relaxed slightly for pl.reciprocal(approx=True).
    assert jnp.allclose(out, ref, atol=2e-3, rtol=2e-3), max_err

    print("KERNEL_OK")
</pallas_src>

<mosaic_0001>
module attributes {stable_mosaic.version = 11 : i64} {
  func.func @_qkv_attention_kernel(%arg0: i32, %arg1: i32, %arg2: memref<4x8x16xf32, #tpu.memory_space<vmem>>, %arg3: memref<4x8x16xf32, #tpu.memory_space<vmem>>, %arg4: memref<4x8x16xf32, #tpu.memory_space<vmem>>, %arg5: memref<4x8x16xf32, #tpu.memory_space<vmem>>) attributes {dimension_semantics = [#tpu.dimension_semantics<parallel>, #tpu.dimension_semantics<parallel>], iteration_bounds = array<i64: 2, 1>, scalar_prefetch = 0 : i64, scratch_operands = 0 : i64, tpu.core_type = #tpu.core_type<tc>, window_params = [{transform_indices = @transform_0, window_bounds = array<i64: 4, 8, 16>}, {transform_indices = @transform_1, window_bounds = array<i64: 4, 8, 16>}, {transform_indices = @transform_2, window_bounds = array<i64: 4, 8, 16>}, {transform_indices = @transform_3, window_bounds = array<i64: 4, 8, 16>}]} {
    %c0 = arith.constant 0 : index
    %c0_0 = arith.constant 0 : index
    %c0_1 = arith.constant 0 : index
    %0 = vector.load %arg2[%c0, %c0_0, %c0_1] : memref<4x8x16xf32, #tpu.memory_space<vmem>>, vector<4x8x16xf32>
    %c0_2 = arith.constant 0 : index
    %c0_3 = arith.constant 0 : index
    %c0_4 = arith.constant 0 : index
    %1 = vector.load %arg3[%c0_2, %c0_3, %c0_4] : memref<4x8x16xf32, #tpu.memory_space<vmem>>, vector<4x8x16xf32>
    %c0_5 = arith.constant 0 : index
    %c0_6 = arith.constant 0 : index
    %c0_7 = arith.constant 0 : index
    %2 = vector.load %arg4[%c0_5, %c0_6, %c0_7] : memref<4x8x16xf32, #tpu.memory_space<vmem>>, vector<4x8x16xf32>
    %cst = arith.constant 0.353553385 : f32
    %3 = vector.broadcast %cst : f32 to vector<4x8x16xf32>
    %4 = arith.mulf %0, %3 : vector<4x8x16xf32>
    %cst_8 = arith.constant dense<0.000000e+00> : vector<4x16x16xf32>
    %5 = tpu.matmul %4, %1, %cst_8 {dimension_numbers = #tpu.dot_dimension_numbers<[1], [1], [2], [2], [0, 0, 0, 2, 1, 2], [0], [0]>} : vector<4x8x16xf32>, vector<4x8x16xf32>, vector<4x16x16xf32> -> vector<4x16x16xf32>
    %cst_9 = arith.constant dense<0xFF800000> : vector<4x16xf32>
    %6 = vector.multi_reduction <maximumf>, %5, %cst_9 [2] : vector<4x16x16xf32> to vector<4x16xf32>
    %7 = vector.shape_cast %6 : vector<4x16xf32> to vector<4x16x1xf32>
    %8 = vector.broadcast %7 : vector<4x16x1xf32> to vector<4x16x16xf32>
    %9 = arith.subf %5, %8 : vector<4x16x16xf32>
    %10 = math.exp %9 : vector<4x16x16xf32>
    %cst_10 = arith.constant dense<0.000000e+00> : vector<4x16xf32>
    %11 = vector.multi_reduction <add>, %10, %cst_10 [2] : vector<4x16x16xf32> to vector<4x16xf32>
    %12 = vector.shape_cast %11 : vector<4x16xf32> to vector<4x16x1xf32>
    %13 = tpu.reciprocal %12 {approx = true} : vector<4x16x1xf32> -> vector<4x16x1xf32>
    %14 = vector.broadcast %13 : vector<4x16x1xf32> to vector<4x16x16xf32>
    %15 = arith.mulf %10, %14 : vector<4x16x16xf32>
    %cst_11 = arith.constant dense<0.000000e+00> : vector<4x8x16xf32>
    %16 = tpu.matmul %2, %15, %cst_11 {dimension_numbers = #tpu.dot_dimension_numbers<[2], [2], [1], [1], [0, 0, 0, 1, 1, 1], [0], [0]>} : vector<4x8x16xf32>, vector<4x16x16xf32>, vector<4x8x16xf32> -> vector<4x8x16xf32>
    %c0_12 = arith.constant 0 : index
    %c0_13 = arith.constant 0 : index
    %c0_14 = arith.constant 0 : index
    %17 = vector.load %arg5[%c0_12, %c0_13, %c0_14] : memref<4x8x16xf32, #tpu.memory_space<vmem>>, vector<4x8x16xf32>
    tpu.vector_store %arg5[%c0_12, %c0_13, %c0_14], %16 {strides = array<i32>} : memref<4x8x16xf32, #tpu.memory_space<vmem>>, vector<4x8x16xf32>,
    return
  }
  func.func @transform_0(%arg0: i32, %arg1: i32) -> (i32, i32, i32) {
    %c3_i32 = arith.constant 3 : i32
    %0 = arith.muli %c3_i32, %arg0 : i32
    %c0_i32 = arith.constant 0 : i32
    %1 = arith.addi %0, %c0_i32 : i32
    %c1_i32 = arith.constant 1 : i32
    %2 = arith.muli %1, %c1_i32 : i32
    %3 = arith.addi %2, %arg1 : i32
    %c0_i32_0 = arith.constant 0 : i32
    %c0_i32_1 = arith.constant 0 : i32
    %c0_i32_2 = arith.constant 0 : i32
    return %3, %c0_i32_0, %c0_i32_1 : i32, i32, i32
  }
  func.func @transform_1(%arg0: i32, %arg1: i32) -> (i32, i32, i32) {
    %c3_i32 = arith.constant 3 : i32
    %0 = arith.muli %c3_i32, %arg0 : i32
    %c1_i32 = arith.constant 1 : i32
    %1 = arith.addi %0, %c1_i32 : i32
    %c1_i32_0 = arith.constant 1 : i32
    %2 = arith.muli %1, %c1_i32_0 : i32
    %3 = arith.addi %2, %arg1 : i32
    %c0_i32 = arith.constant 0 : i32
    %c0_i32_1 = arith.constant 0 : i32
    %c0_i32_2 = arith.constant 0 : i32
    return %3, %c0_i32, %c0_i32_1 : i32, i32, i32
  }
  func.func @transform_2(%arg0: i32, %arg1: i32) -> (i32, i32, i32) {
    %c3_i32 = arith.constant 3 : i32
    %0 = arith.muli %c3_i32, %arg0 : i32
    %c2_i32 = arith.constant 2 : i32
    %1 = arith.addi %0, %c2_i32 : i32
    %c1_i32 = arith.constant 1 : i32
    %2 = arith.muli %1, %c1_i32 : i32
    %3 = arith.addi %2, %arg1 : i32
    %c0_i32 = arith.constant 0 : i32
    %c0_i32_0 = arith.constant 0 : i32
    %c0_i32_1 = arith.constant 0 : i32
    return %3, %c0_i32, %c0_i32_0 : i32, i32, i32
  }
  func.func @transform_3(%arg0: i32, %arg1: i32) -> (i32, i32, i32) {
    %c1_i32 = arith.constant 1 : i32
    %0 = arith.muli %arg0, %c1_i32 : i32
    %1 = arith.addi %0, %arg1 : i32
    %c0_i32 = arith.constant 0 : i32
    %c0_i32_0 = arith.constant 0 : i32
    %c0_i32_1 = arith.constant 0 : i32
    return %1, %c0_i32, %c0_i32_0 : i32, i32, i32
  }
}

</mosaic_0001>

<llo_original>
// kernel: qkv_attention_pallas.1
$region0: #{qkv_attention_pallas.1}
  #allocation0 [shape = 'u32[]', space=smem, size = 0x4, offset = 0x4, fixed_abs, tag = 'smem constant byte address 0x4 - core index']
  #allocation1 [shape = 'u32[144,128]{1,0:T(1,128)}', space=vmem, size = 0x12000, scoped, tag = 'internal scratch']
  %s0 = inlined_call_operand.vmem [shape: f32[24,8,16], index: 0, kind: input, shape index: {}, may-alias: {0,1,2}]
  %s1 = inlined_call_operand.vmem [shape: f32[24,8,16], index: 1, kind: input, shape index: {}, may-alias: {0,1,2}]
  %s2 = inlined_call_operand.vmem [shape: f32[24,8,16], index: 2, kind: input, shape index: {}, may-alias: {0,1,2}]
  %s3 = inlined_call_operand.vmem [shape: f32[8,8,16], index: 3, kind: output, shape index: {}]
  %s4 = sld [smem:[#allocation0]]
  $region45: #{qkv_attention_pallas.1} parent=0
    _
  %s6 = ssub.s32 1, %s4
  %s7 = scalar_select 0, %s6, %s4
  loop: start=0, step=1, limit=4
  $region2: #{qkv_attention_pallas.1} parent=0 // loop_pre_header
    _
  $region3: #{qkv_attention_pallas.1} parent=0 // loop_header
    %s9 = sphi 0, %s13
    %p10 = scmp.ge.s32.totalorder %s9, 4
    %s16 = sphi 0, %s28
    %s17 = sphi 0, %s24
    %s18 = sphi 0, %s16
    %s19 = sphi 0, %s17
    %s20 = sphi 0, %s18
    %s21 = sphi 0, %s19
    %s35 = sphi 0, %s37
    %s38 = sphi 0, %s35
    %s39 = sphi 0, %s38
    %s55 = sphi 0, %s39
    %s67 = sphi 0, %s69
    %s70 = sphi 0, %s67
    %s71 = sphi 0, %s70
    %s87 = sphi 0, %s71
    %s99 = sphi 0, %s101
    %s102 = sphi 0, %s99
    %s103 = sphi 0, %s102
    %s119 = sphi 0, %s103
    %s127 = sphi 0, %s129
    %s130 = sphi 0, %s127
    %s131 = sphi 0, %s130
    %s147 = sphi 0, %s131
  $region4: #{qkv_attention_pallas.1} parent=0 // loop_header_branch
    %12 = sbr.rel (%p10) target = $region8
  $region5: #{qkv_attention_pallas.1} parent=0 // loop_body
    %s14 = ssub.s32 %s9, 1
    %s15 = ssub.s32 %s9, 2
    %s22 = sadd.s32 1, %s17
    %p23 = scmp.ge.s32.totalorder %s22, 1
    %s24 = scalar_select %p23, 0, %s22
    %s25 = sadd.s32 1, %s16
    %s26 = scalar_select %p23, %s25, %s16
    %p27 = scmp.ge.s32.totalorder %s26, 2
    %s28 = scalar_select %p27, 0, %s26
    %s29 = smul.u32 %s16, 3
    %s30 = sadd.s32 %s29, %s17
    %s31 = smul.u32 %s28, 3
    %s32 = sadd.s32 %s31, %s24
    %s33 = ssub.s32 %s30, %s32
    %p34 = scmp.eq.s32.totalorder %s33, 0
    %s36 = sadd.s32 %s35, 1
    %s37 = scalar_select %p34, %s35, %s36
    %p40 = pneg %p34
    %p41 = scmp.eq.s32.totalorder %s9, 1
    %p42 = por %p40, %p41
    %p43 = scmp.ne.s32.totalorder %s35, %s38
    %p44 = scmp.eq.s32.totalorder %s9, 0
    %p45 = por %p43, %p44
    %p46 = scmp.ne.s32.totalorder %s35, %s38
    %p47 = scmp.eq.s32.totalorder %s14, 1
    %p48 = por %p46, %p47
    %p49 = scmp.ne.s32.totalorder %s38, %s39
    %p50 = scmp.eq.s32.totalorder %s14, 0
    %p51 = por %p49, %p50
    %p52 = scmp.ne.s32.totalorder %s38, %s39
    %p53 = scmp.eq.s32.totalorder %s15, 1
    %p54 = por %p52, %p53
    %p56 = scmp.ne.s32.totalorder %s39, %s55
    %p57 = scmp.eq.s32.totalorder %s15, 0
    %p58 = por %p56, %p57
    %s59 = smul.u32 %s16, 3
    %s60 = sadd.s32 %s59, 1
    %s61 = sadd.s32 %s60, %s17
    %s62 = smul.u32 %s28, 3
    %s63 = sadd.s32 %s62, 1
    %s64 = sadd.s32 %s63, %s24
    %s65 = ssub.s32 %s61, %s64
    %p66 = scmp.eq.s32.totalorder %s65, 0
    %s68 = sadd.s32 %s67, 1
    %s69 = scalar_select %p66, %s67, %s68
    %p72 = pneg %p66
    %p73 = scmp.eq.s32.totalorder %s9, 1
    %p74 = por %p72, %p73
    %p75 = scmp.ne.s32.totalorder %s67, %s70
    %p76 = scmp.eq.s32.totalorder %s9, 0
    %p77 = por %p75, %p76
    %p78 = scmp.ne.s32.totalorder %s67, %s70
    %p79 = scmp.eq.s32.totalorder %s14, 1
    %p80 = por %p78, %p79
    %p81 = scmp.ne.s32.totalorder %s70, %s71
    %p82 = scmp.eq.s32.totalorder %s14, 0
    %p83 = por %p81, %p82
    %p84 = scmp.ne.s32.totalorder %s70, %s71
    %p85 = scmp.eq.s32.totalorder %s15, 1
    %p86 = por %p84, %p85
    %p88 = scmp.ne.s32.totalorder %s71, %s87
    %p89 = scmp.eq.s32.totalorder %s15, 0
    %p90 = por %p88, %p89
    %s91 = smul.u32 %s16, 3
    %s92 = sadd.s32 %s91, 2
    %s93 = sadd.s32 %s92, %s17
    %s94 = smul.u32 %s28, 3
    %s95 = sadd.s32 %s94, 2
    %s96 = sadd.s32 %s95, %s24
    %s97 = ssub.s32 %s93, %s96
    %p98 = scmp.eq.s32.totalorder %s97, 0
    %s100 = sadd.s32 %s99, 1
    %s101 = scalar_select %p98, %s99, %s100
    %p104 = pneg %p98
    %p105 = scmp.eq.s32.totalorder %s9, 1
    %p106 = por %p104, %p105
    %p107 = scmp.ne.s32.totalorder %s99, %s102
    %p108 = scmp.eq.s32.totalorder %s9, 0
    %p109 = por %p107, %p108
    %p110 = scmp.ne.s32.totalorder %s99, %s102
    %p111 = scmp.eq.s32.totalorder %s14, 1
    %p112 = por %p110, %p111
    %p113 = scmp.ne.s32.totalorder %s102, %s103
    %p114 = scmp.eq.s32.totalorder %s14, 0
    %p115 = por %p113, %p114
    %p116 = scmp.ne.s32.totalorder %s102, %s103
    %p117 = scmp.eq.s32.totalorder %s15, 1
    %p118 = por %p116, %p117
    %p120 = scmp.ne.s32.totalorder %s103, %s119
    %p121 = scmp.eq.s32.totalorder %s15, 0
    %p122 = por %p120, %p121
    %s123 = sadd.s32 %s16, %s17
    %s124 = sadd.s32 %s28, %s24
    %s125 = ssub.s32 %s123, %s124
    %p126 = scmp.eq.s32.totalorder %s125, 0
    %s128 = sadd.s32 %s127, 1
    %s129 = scalar_select %p126, %s127, %s128
    %p132 = pneg %p126
    %p133 = scmp.eq.s32.totalorder %s9, 1
    %p134 = por %p132, %p133
    %p135 = scmp.ne.s32.totalorder %s127, %s130
    %p136 = scmp.eq.s32.totalorder %s9, 0
    %p137 = por %p135, %p136
    %p138 = scmp.ne.s32.totalorder %s127, %s130
    %p139 = scmp.eq.s32.totalorder %s14, 1
    %p140 = por %p138, %p139
    %p141 = scmp.ne.s32.totalorder %s130, %s131
    %p142 = scmp.eq.s32.totalorder %s14, 0
    %p143 = por %p141, %p142
    %p144 = scmp.ne.s32.totalorder %s130, %s131
    %p145 = scmp.eq.s32.totalorder %s15, 1
    %p146 = por %p144, %p145
    %p148 = scmp.ne.s32.totalorder %s131, %s147
    %p149 = scmp.eq.s32.totalorder %s15, 0
    %p150 = por %p148, %p149
    %p151 = scmp.le.s32.totalorder 1, %s9
    %p152 = scmp.lt.s32.totalorder %s9, 3
    %p153 = pnand %p151, %p152
    %p154 = pneg %p153
    // Predicated region
    $region9: #{qkv_attention_pallas.1} parent=5 // pred_check
      _
    $region10: #{qkv_attention_pallas.1} parent=5 // pred_check_branch
      %156 = sbr.rel (%p153) target = $region12
    $region11: #{qkv_attention_pallas.1} parent=5 // pred_region
      %s157 = ssub.s32 %s9, 1
    $region12: #{qkv_attention_pallas.1} parent=5 // pred_fallthru
      _
    %p158 = scmp.lt.s32.totalorder %s9, 2
    // Predicated region
    $region13: #{qkv_attention_pallas.1} parent=5 // pred_check
      %p159 = pneg %p158
    $region14: #{qkv_attention_pallas.1} parent=5 // pred_check_branch
      %161 = sbr.rel (%p159) target = $region16
    $region15: #{qkv_attention_pallas.1} parent=5 // pred_region
      // Predicated region
      $region17: #{qkv_attention_pallas.1} parent=15 // pred_check
        %p162 = pneg %p45
      $region18: #{qkv_attention_pallas.1} parent=15 // pred_check_branch
        %164 = sbr.rel (%p162) target = $region20
      $region19: #{qkv_attention_pallas.1} parent=15 // pred_region
        %s165 = smul.u32 %s16, 3
        %s166 = sadd.s32 %s165, %s17
        %s167 = smul.u32 4, %s166
        %p168 = scmp.lt.s32.totalorder %s167, 23
        %s169 = scalar_select %p168, %s167, 23
        %s170 = smul.addr %s169, 8
        %s171 = scalar_lea.vmem %s0, %s170
        %s172 = smul.u32 %s16, 3
        %s173 = sadd.s32 %s172, %s17
        %s174 = smul.u32 4, %s173
      $region20: #{qkv_attention_pallas.1} parent=15 // pred_fallthru
        _
      // Predicated region
      $region21: #{qkv_attention_pallas.1} parent=15 // pred_check
        %p175 = pneg %p77
      $region22: #{qkv_attention_pallas.1} parent=15 // pred_check_branch
        %177 = sbr.rel (%p175) target = $region24
      $region23: #{qkv_attention_pallas.1} parent=15 // pred_region
        %s178 = smul.u32 %s16, 3
        %s179 = sadd.s32 %s178, 1
        %s180 = sadd.s32 %s179, %s17
        %s181 = smul.u32 4, %s180
        %p182 = scmp.lt.s32.totalorder %s181, 23
        %s183 = scalar_select %p182, %s181, 23
        %s184 = smul.addr %s183, 8
        %s185 = scalar_lea.vmem %s1, %s184
        %s186 = smul.u32 %s16, 3
        %s187 = sadd.s32 %s186, 1
        %s188 = sadd.s32 %s187, %s17
        %s189 = smul.u32 4, %s188
      $region24: #{qkv_attention_pallas.1} parent=15 // pred_fallthru
        _
      // Predicated region
      $region25: #{qkv_attention_pallas.1} parent=15 // pred_check
        %p190 = pneg %p109
      $region26: #{qkv_attention_pallas.1} parent=15 // pred_check_branch
        %192 = sbr.rel (%p190) target = $region28
      $region27: #{qkv_attention_pallas.1} parent=15 // pred_region
        %s193 = smul.u32 %s16, 3
        %s194 = sadd.s32 %s193, 2
        %s195 = sadd.s32 %s194, %s17
        %s196 = smul.u32 4, %s195
        %p197 = scmp.lt.s32.totalorder %s196, 23
        %s198 = scalar_select %p197, %s196, 23
        %s199 = smul.addr %s198, 8
        %s200 = scalar_lea.vmem %s2, %s199
        %s201 = smul.u32 %s16, 3
        %s202 = sadd.s32 %s201, 2
        %s203 = sadd.s32 %s202, %s17
        %s204 = smul.u32 4, %s203
      $region28: #{qkv_attention_pallas.1} parent=15 // pred_fallthru
        _
    $region16: #{qkv_attention_pallas.1} parent=5 // pred_fallthru
      _
    %p205 = scmp.le.s32.totalorder 1, %s9
    %p206 = scmp.lt.s32.totalorder %s9, 3
    %p207 = pnand %p205, %p206
    %p208 = pneg %p207
    // Predicated region
    $region29: #{qkv_attention_pallas.1} parent=5 // pred_check
      _
    $region30: #{qkv_attention_pallas.1} parent=5 // pred_check_branch
      %210 = sbr.rel (%p207) target = $region32
    $region31: #{qkv_attention_pallas.1} parent=5 // pred_region
      %s211 = ssub.s32 %s9, 1
      %s212 = smul.u32 %s18, 3
      %s213 = sadd.s32 %s212, %s19
      %s214 = smul.u32 4, %s213
      %p215 = scmp.lt.s32.totalorder %s214, 23
      %s216 = scalar_select %p215, %s214, 23
      %s217 = smul.addr %s216, 8
      %s218 = scalar_lea.vmem %s0, %s217
      %p219 = pneg %p51
      %p220 = pneg %p48
      %s221 = smul.u32 %s18, 3
      %s222 = sadd.s32 %s221, 1
      %s223 = sadd.s32 %s222, %s19
      %s224 = smul.u32 4, %s223
      %p225 = scmp.lt.s32.totalorder %s224, 23
      %s226 = scalar_select %p225, %s224, 23
      %s227 = smul.addr %s226, 8
      %s228 = scalar_lea.vmem %s1, %s227
      %p229 = pneg %p83
      %p230 = pneg %p80
      %s231 = smul.u32 %s18, 3
      %s232 = sadd.s32 %s231, 2
      %s233 = sadd.s32 %s232, %s19
      %s234 = smul.u32 4, %s233
      %p235 = scmp.lt.s32.totalorder %s234, 23
      %s236 = scalar_select %p235, %s234, 23
      %s237 = smul.addr %s236, 8
      %s238 = scalar_lea.vmem %s2, %s237
      %p239 = pneg %p115
      %p240 = pneg %p112
      %p241 = pneg %p143
      %p242 = pneg %p140
      %s243 = sadd.s32 %s18, %s19
      %s244 = smul.u32 4, %s243
      %p245 = scmp.lt.s32.totalorder %s244, 7
      %s246 = scalar_select %p245, %s244, 7
      %s247 = smul.addr %s246, 8
      %s248 = scalar_lea.vmem %s3, %s247
      %s249 = smul.u32 %s18, 3
      %s250 = sadd.s32 %s249, %s19
      %s251 = smul.u32 4, %s250
      %p252 = scmp.lt.s32.totalorder %s251, 23
      %s253 = scalar_select %p252, %s251, 23
      %s254 = smul.addr %s253, 8
      %s255 = scalar_lea.vmem %s0, %s254
      %s256 = smul.u32 %s18, 3
      %s257 = sadd.s32 %s256, %s19
      %s258 = smul.u32 4, %s257
      %s259 = smul.u32 %s18, 3
      %s260 = sadd.s32 %s259, 1
      %s261 = sadd.s32 %s260, %s19
      %s262 = smul.u32 4, %s261
      %p263 = scmp.lt.s32.totalorder %s262, 23
      %s264 = scalar_select %p263, %s262, 23
      %s265 = smul.addr %s264, 8
      %s266 = scalar_lea.vmem %s1, %s265
      %s267 = smul.u32 %s18, 3
      %s268 = sadd.s32 %s267, 1
      %s269 = sadd.s32 %s268, %s19
      %s270 = smul.u32 4, %s269
      %s271 = smul.u32 %s18, 3
      %s272 = sadd.s32 %s271, 2
      %s273 = sadd.s32 %s272, %s19
      %s274 = smul.u32 4, %s273
      %p275 = scmp.lt.s32.totalorder %s274, 23
      %s276 = scalar_select %p275, %s274, 23
      %s277 = smul.addr %s276, 8
      %s278 = scalar_lea.vmem %s2, %s277
      %s279 = smul.u32 %s18, 3
      %s280 = sadd.s32 %s279, 2
      %s281 = sadd.s32 %s280, %s19
      %s282 = smul.u32 4, %s281
      %s283 = sadd.s32 %s18, %s19
      %s284 = smul.u32 4, %s283
      %p285 = scmp.lt.s32.totalorder %s284, 7
      %s286 = scalar_select %p285, %s284, 7
      %s287 = smul.addr %s286, 8
      %s288 = scalar_lea.vmem %s3, %s287
      %s289 = sadd.s32 %s18, %s19
      %s290 = smul.u32 4, %s289
      %v291 = vld [vmem:[%s255] sm:$0xff]
      %v292 = vld [vmem:[%s255 + $0x8] sm:$0xff]
      %v293 = vld [vmem:[%s255 + $0x10] sm:$0xff]
      %v294 = vld [vmem:[%s255 + $0x18] sm:$0xff]
      %v295 = vld [vmem:[%s266] sm:$0xff]
      %v296 = vld [vmem:[%s266 + $0x8] sm:$0xff]
      %v297 = vld [vmem:[%s266 + $0x10] sm:$0xff]
      %v298 = vld [vmem:[%s266 + $0x18] sm:$0xff]
      %v299 = vld [vmem:[%s278] sm:$0xff]
      %v300 = vld [vmem:[%s278 + $0x8] sm:$0xff]
      %v301 = vld [vmem:[%s278 + $0x10] sm:$0xff]
      %v302 = vld [vmem:[%s278 + $0x18] sm:$0xff]
      %v303 = vmul.f32 %v291, 0.35355338
      %v304 = vmul.f32 %v292, 0.35355338
      %v305 = vmul.f32 %v293, 0.35355338
      %v306 = vmul.f32 %v294, 0.35355338
      %307 = vxpose.xlu0.b32.start [1/16] %v303, 128
      %308 = vxpose.xlu0.b32.cont [2/16] 0.0, 128
      %309 = vxpose.xlu0.b32.cont [3/16] 0.0, 128
      %310 = vxpose.xlu0.b32.cont [4/16] 0.0, 128
      %311 = vxpose.xlu0.b32.cont [5/16] 0.0, 128
      %312 = vxpose.xlu0.b32.cont [6/16] 0.0, 128
      %313 = vxpose.xlu0.b32.cont [7/16] 0.0, 128
      %314 = vxpose.xlu0.b32.cont [8/16] 0.0, 128
      %315 = vxpose.xlu0.b32.cont [9/16] 0.0, 128
      %316 = vxpose.xlu0.b32.cont [10/16] 0.0, 128
      %317 = vxpose.xlu0.b32.cont [11/16] 0.0, 128
      %318 = vxpose.xlu0.b32.cont [12/16] 0.0, 128
      %319 = vxpose.xlu0.b32.cont [13/16] 0.0, 128
      %320 = vxpose.xlu0.b32.cont [14/16] 0.0, 128
      %321 = vxpose.xlu0.b32.cont [15/16] 0.0, 128
      %322 = vxpose.xlu0.b32.end [16/16] 0.0, 128
      %v323 = vpop.trf.xlu0
      %v324 = vpop.trf.xlu0
      %v325 = vpop.trf.xlu0
      %v326 = vpop.trf.xlu0
      %v327 = vpop.trf.xlu0
      %v328 = vpop.trf.xlu0
      %v329 = vpop.trf.xlu0
      %v330 = vpop.trf.xlu0
      %v331 = vpop.trf.xlu0
      %v332 = vpop.trf.xlu0
      %v333 = vpop.trf.xlu0
      %v334 = vpop.trf.xlu0
      %v335 = vpop.trf.xlu0
      %v336 = vpop.trf.xlu0
      %v337 = vpop.trf.xlu0
      %v338 = vpop.trf.xlu0
      %vm339 = vcmask 64512
      %v341 = vsel %vm339, %v323, 0
      %v344 = vsel %vm339, %v324, 0
      %346 = vmatprep.subr.mxu0 0.0
      %347 = vmatpush1.msra.mxu0 %v295
      %348 = vmatprep.subr.mxu0 0.0
      %349 = vmatpush1.msra.mxu0 0.0
      %350 = vmatprep.subr.mxu0 0.0
      %351 = vmatpush1.msra.mxu0 0.0
      %352 = vmatprep.subr.mxu0 0.0
      %353 = vmatpush1.msra.mxu0 0.0
      %354 = vmatprep.subr.mxu0 0.0
      %355 = vmatpush1.msra.mxu0 0.0
      %356 = vmatprep.subr.mxu0 0.0
      %357 = vmatpush1.msra.mxu0 0.0
      %358 = vmatprep.subr.mxu0 0.0
      %359 = vmatpush1.msra.mxu0 0.0
      %360 = vmatprep.subr.mxu0 0.0
      %361 = vmatpush1.msra.mxu0 0.0
      %362 = vmatprep.subr.mxu0 0.0
      %363 = vmatpush1.msra.mxu0 0.0
      %364 = vmatprep.subr.mxu0 0.0
      %365 = vmatpush1.msra.mxu0 0.0
      %366 = vmatprep.subr.mxu0 0.0
      %367 = vmatpush1.msra.mxu0 0.0
      %368 = vmatprep.subr.mxu0 0.0
      %369 = vmatpush1.msra.mxu0 0.0
      %370 = vmatprep.subr.mxu0 0.0
      %371 = vmatpush1.msra.mxu0 0.0
      %372 = vmatprep.subr.mxu0 0.0
      %373 = vmatpush1.msra.mxu0 0.0
      %374 = vmatprep.subr.mxu0 0.0
      %375 = vmatpush1.msra.mxu0 0.0
      %376 = vmatprep.subr.mxu0 0.0
      %377 = vmatpush1.msra.mxu0 0.0
      %378 = vmatprep.subr.mxu0 0.0
      %379 = vmatpush1.msra.mxu0 0.0
      %380 = vmatprep.subr.mxu0 0.0
      %381 = vmatpush1.msra.mxu0 0.0
      %382 = vmatprep.subr.mxu0 0.0
      %383 = vmatpush1.msra.mxu0 0.0
      %384 = vmatprep.subr.mxu0 0.0
      %385 = vmatpush1.msra.mxu0 0.0
      %386 = vmatprep.subr.mxu0 0.0
      %387 = vmatpush1.msra.mxu0 0.0
      %388 = vmatprep.subr.mxu0 0.0
      %389 = vmatpush1.msra.mxu0 0.0
      %390 = vmatprep.subr.mxu0 0.0
      %391 = vmatpush1.msra.mxu0 0.0
      %392 = vmatprep.subr.mxu0 0.0
      %393 = vmatpush1.msra.mxu0 0.0
      %394 = vmatprep.subr.mxu0 0.0
      %395 = vmatpush1.msra.mxu0 0.0
      %396 = vmatprep.subr.mxu0 0.0
      %397 = vmatpush1.msra.mxu0 0.0
      %398 = vmatprep.subr.mxu0 0.0
      %399 = vmatpush1.msra.mxu0 0.0
      %400 = vmatprep.subr.mxu0 0.0
      %401 = vmatpush1.msra.mxu0 0.0
      %402 = vmatprep.subr.mxu0 0.0
      %403 = vmatpush1.msra.mxu0 0.0
      %404 = vmatprep.subr.mxu0 0.0
      %405 = vmatpush1.msra.mxu0 0.0
      %406 = vmatprep.subr.mxu0 0.0
      %407 = vmatpush1.msra.mxu0 0.0
      %408 = vmatprep.subr.mxu0 0.0
      %409 = vmatpush1.msra.mxu0 0.0
      %410 = vmatprep.mubr.f32.mxu0 0.0
      %411 = vmatmul.mubr.f32.gmra.mrb[0].mxu0 %v341
      %v412 = vpop.f32.mrb[0].mxu0
      %v413 = vadd.f32 0.0, %v412
      %v414 = vpop.f32.mrb[0].mxu0
      %415 = vmatprep.mubr.f32.mxu0 0.0
      %416 = vmatmul.mubr.f32.gmra.mrb[0].mxu0 %v344
      %v417 = vpop.f32.mrb[0].mxu0
      %v418 = vadd.f32 0.0, %v417
      %v419 = vpop.f32.mrb[0].mxu0
      %420 = vdwg.mxu0
      %421 = vxpose.xlu0.b32.start [1/16] %v304, 128
      %422 = vxpose.xlu0.b32.cont [2/16] 0.0, 128
      %423 = vxpose.xlu0.b32.cont [3/16] 0.0, 128
      %424 = vxpose.xlu0.b32.cont [4/16] 0.0, 128
      %425 = vxpose.xlu0.b32.cont [5/16] 0.0, 128
      %426 = vxpose.xlu0.b32.cont [6/16] 0.0, 128
      %427 = vxpose.xlu0.b32.cont [7/16] 0.0, 128
      %428 = vxpose.xlu0.b32.cont [8/16] 0.0, 128
      %429 = vxpose.xlu0.b32.cont [9/16] 0.0, 128
      %430 = vxpose.xlu0.b32.cont [10/16] 0.0, 128
      %431 = vxpose.xlu0.b32.cont [11/16] 0.0, 128
      %432 = vxpose.xlu0.b32.cont [12/16] 0.0, 128
      %433 = vxpose.xlu0.b32.cont [13/16] 0.0, 128
      %434 = vxpose.xlu0.b32.cont [14/16] 0.0, 128
      %435 = vxpose.xlu0.b32.cont [15/16] 0.0, 128
      %436 = vxpose.xlu0.b32.end [16/16] 0.0, 128
      %v437 = vpop.trf.xlu0
      %v438 = vpop.trf.xlu0
      %v439 = vpop.trf.xlu0
      %v440 = vpop.trf.xlu0
      %v441 = vpop.trf.xlu0
      %v442 = vpop.trf.xlu0
      %v443 = vpop.trf.xlu0
      %v444 = vpop.trf.xlu0
      %v445 = vpop.trf.xlu0
      %v446 = vpop.trf.xlu0
      %v447 = vpop.trf.xlu0
      %v448 = vpop.trf.xlu0
      %v449 = vpop.trf.xlu0
      %v450 = vpop.trf.xlu0
      %v451 = vpop.trf.xlu0
      %v452 = vpop.trf.xlu0
      %v454 = vsel %vm339, %v437, 0
      %v457 = vsel %vm339, %v438, 0
      %459 = vmatprep.subr.mxu0 0.0
      %460 = vmatpush1.msra.mxu0 %v296
      %461 = vmatprep.subr.mxu0 0.0
      %462 = vmatpush1.msra.mxu0 0.0
      %463 = vmatprep.subr.mxu0 0.0
      %464 = vmatpush1.msra.mxu0 0.0
      %465 = vmatprep.subr.mxu0 0.0
      %466 = vmatpush1.msra.mxu0 0.0
      %467 = vmatprep.subr.mxu0 0.0
      %468 = vmatpush1.msra.mxu0 0.0
      %469 = vmatprep.subr.mxu0 0.0
      %470 = vmatpush1.msra.mxu0 0.0
      %471 = vmatprep.subr.mxu0 0.0
      %472 = vmatpush1.msra.mxu0 0.0
      %473 = vmatprep.subr.mxu0 0.0
      %474 = vmatpush1.msra.mxu0 0.0
      %475 = vmatprep.subr.mxu0 0.0
      %476 = vmatpush1.msra.mxu0 0.0
      %477 = vmatprep.subr.mxu0 0.0
      %478 = vmatpush1.msra.mxu0 0.0
      %479 = vmatprep.subr.mxu0 0.0
      %480 = vmatpush1.msra.mxu0 0.0
      %481 = vmatprep.subr.mxu0 0.0
      %482 = vmatpush1.msra.mxu0 0.0
      %483 = vmatprep.subr.mxu0 0.0
      %484 = vmatpush1.msra.mxu0 0.0
      %485 = vmatprep.subr.mxu0 0.0
      %486 = vmatpush1.msra.mxu0 0.0
      %487 = vmatprep.subr.mxu0 0.0
      %488 = vmatpush1.msra.mxu0 0.0
      %489 = vmatprep.subr.mxu0 0.0
      %490 = vmatpush1.msra.mxu0 0.0
      %491 = vmatprep.subr.mxu0 0.0
      %492 = vmatpush1.msra.mxu0 0.0
      %493 = vmatprep.subr.mxu0 0.0
      %494 = vmatpush1.msra.mxu0 0.0
      %495 = vmatprep.subr.mxu0 0.0
      %496 = vmatpush1.msra.mxu0 0.0
      %497 = vmatprep.subr.mxu0 0.0
      %498 = vmatpush1.msra.mxu0 0.0
      %499 = vmatprep.subr.mxu0 0.0
      %500 = vmatpush1.msra.mxu0 0.0
      %501 = vmatprep.subr.mxu0 0.0
      %502 = vmatpush1.msra.mxu0 0.0
      %503 = vmatprep.subr.mxu0 0.0
      %504 = vmatpush1.msra.mxu0 0.0
      %505 = vmatprep.subr.mxu0 0.0
      %506 = vmatpush1.msra.mxu0 0.0
      %507 = vmatprep.subr.mxu0 0.0
      %508 = vmatpush1.msra.mxu0 0.0
      %509 = vmatprep.subr.mxu0 0.0
      %510 = vmatpush1.msra.mxu0 0.0
      %511 = vmatprep.subr.mxu0 0.0
      %512 = vmatpush1.msra.mxu0 0.0
      %513 = vmatprep.subr.mxu0 0.0
      %514 = vmatpush1.msra.mxu0 0.0
      %515 = vmatprep.subr.mxu0 0.0
      %516 = vmatpush1.msra.mxu0 0.0
      %517 = vmatprep.subr.mxu0 0.0
      %518 = vmatpush1.msra.mxu0 0.0
      %519 = vmatprep.subr.mxu0 0.0
      %520 = vmatpush1.msra.mxu0 0.0
      %521 = vmatprep.subr.mxu0 0.0
      %522 = vmatpush1.msra.mxu0 0.0
      %523 = vmatprep.mubr.f32.mxu0 0.0
      %524 = vmatmul.mubr.f32.gmra.mrb[0].mxu0 %v454
      %v525 = vpop.f32.mrb[0].mxu0
      %v526 = vadd.f32 0.0, %v525
      %v527 = vpop.f32.mrb[0].mxu0
      %528 = vmatprep.mubr.f32.mxu0 0.0
      %529 = vmatmul.mubr.f32.gmra.mrb[0].mxu0 %v457
      %v530 = vpop.f32.mrb[0].mxu0
      %v531 = vadd.f32 0.0, %v530
      %v532 = vpop.f32.mrb[0].mxu0
      %533 = vdwg.mxu0
      %534 = vxpose.xlu0.b32.start [1/16] %v305, 128
      %535 = vxpose.xlu0.b32.cont [2/16] 0.0, 128
      %536 = vxpose.xlu0.b32.cont [3/16] 0.0, 128
      %537 = vxpose.xlu0.b32.cont [4/16] 0.0, 128
      %538 = vxpose.xlu0.b32.cont [5/16] 0.0, 128
      %539 = vxpose.xlu0.b32.cont [6/16] 0.0, 128
      %540 = vxpose.xlu0.b32.cont [7/16] 0.0, 128
      %541 = vxpose.xlu0.b32.cont [8/16] 0.0, 128
      %542 = vxpose.xlu0.b32.cont [9/16] 0.0, 128
      %543 = vxpose.xlu0.b32.cont [10/16] 0.0, 128
      %544 = vxpose.xlu0.b32.cont [11/16] 0.0, 128
      %545 = vxpose.xlu0.b32.cont [12/16] 0.0, 128
      %546 = vxpose.xlu0.b32.cont [13/16] 0.0, 128
      %547 = vxpose.xlu0.b32.cont [14/16] 0.0, 128
      %548 = vxpose.xlu0.b32.cont [15/16] 0.0, 128
      %549 = vxpose.xlu0.b32.end [16/16] 0.0, 128
      %v550 = vpop.trf.xlu0
      %v551 = vpop.trf.xlu0
      %v552 = vpop.trf.xlu0
      %v553 = vpop.trf.xlu0
      %v554 = vpop.trf.xlu0
      %v555 = vpop.trf.xlu0
      %v556 = vpop.trf.xlu0
      %v557 = vpop.trf.xlu0
      %v558 = vpop.trf.xlu0
      %v559 = vpop.trf.xlu0
      %v560 = vpop.trf.xlu0
      %v561 = vpop.trf.xlu0
      %v562 = vpop.trf.xlu0
      %v563 = vpop.trf.xlu0
      %v564 = vpop.trf.xlu0
      %v565 = vpop.trf.xlu0
      %v567 = vsel %vm339, %v550, 0
      %v570 = vsel %vm339, %v551, 0
      %572 = vmatprep.subr.mxu0 0.0
      %573 = vmatpush1.msra.mxu0 %v297
      %574 = vmatprep.subr.mxu0 0.0
      %575 = vmatpush1.msra.mxu0 0.0
      %576 = vmatprep.subr.mxu0 0.0
      %577 = vmatpush1.msra.mxu0 0.0
      %578 = vmatprep.subr.mxu0 0.0
      %579 = vmatpush1.msra.mxu0 0.0
      %580 = vmatprep.subr.mxu0 0.0
      %581 = vmatpush1.msra.mxu0 0.0
      %582 = vmatprep.subr.mxu0 0.0
      %583 = vmatpush1.msra.mxu0 0.0
      %584 = vmatprep.subr.mxu0 0.0
      %585 = vmatpush1.msra.mxu0 0.0
      %586 = vmatprep.subr.mxu0 0.0
      %587 = vmatpush1.msra.mxu0 0.0
      %588 = vmatprep.subr.mxu0 0.0
      %589 = vmatpush1.msra.mxu0 0.0
      %590 = vmatprep.subr.mxu0 0.0
      %591 = vmatpush1.msra.mxu0 0.0
      %592 = vmatprep.subr.mxu0 0.0
      %593 = vmatpush1.msra.mxu0 0.0
      %594 = vmatprep.subr.mxu0 0.0
      %595 = vmatpush1.msra.mxu0 0.0
      %596 = vmatprep.subr.mxu0 0.0
      %597 = vmatpush1.msra.mxu0 0.0
      %598 = vmatprep.subr.mxu0 0.0
      %599 = vmatpush1.msra.mxu0 0.0
      %600 = vmatprep.subr.mxu0 0.0
      %601 = vmatpush1.msra.mxu0 0.0
      %602 = vmatprep.subr.mxu0 0.0
      %603 = vmatpush1.msra.mxu0 0.0
      %604 = vmatprep.subr.mxu0 0.0
      %605 = vmatpush1.msra.mxu0 0.0
      %606 = vmatprep.subr.mxu0 0.0
      %607 = vmatpush1.msra.mxu0 0.0
      %608 = vmatprep.subr.mxu0 0.0
      %609 = vmatpush1.msra.mxu0 0.0
      %610 = vmatprep.subr.mxu0 0.0
      %611 = vmatpush1.msra.mxu0 0.0
      %612 = vmatprep.subr.mxu0 0.0
      %613 = vmatpush1.msra.mxu0 0.0
      %614 = vmatprep.subr.mxu0 0.0
      %615 = vmatpush1.msra.mxu0 0.0
      %616 = vmatprep.subr.mxu0 0.0
      %617 = vmatpush1.msra.mxu0 0.0
      %618 = vmatprep.subr.mxu0 0.0
      %619 = vmatpush1.msra.mxu0 0.0
      %620 = vmatprep.subr.mxu0 0.0
      %621 = vmatpush1.msra.mxu0 0.0
      %622 = vmatprep.subr.mxu0 0.0
      %623 = vmatpush1.msra.mxu0 0.0
      %624 = vmatprep.subr.mxu0 0.0
      %625 = vmatpush1.msra.mxu0 0.0
      %626 = vmatprep.subr.mxu0 0.0
      %627 = vmatpush1.msra.mxu0 0.0
      %628 = vmatprep.subr.mxu0 0.0
      %629 = vmatpush1.msra.mxu0 0.0
      %630 = vmatprep.subr.mxu0 0.0
      %631 = vmatpush1.msra.mxu0 0.0
      %632 = vmatprep.subr.mxu0 0.0
      %633 = vmatpush1.msra.mxu0 0.0
      %634 = vmatprep.subr.mxu0 0.0
      %635 = vmatpush1.msra.mxu0 0.0
      %636 = vmatprep.mubr.f32.mxu0 0.0
      %637 = vmatmul.mubr.f32.gmra.mrb[0].mxu0 %v567
      %v638 = vpop.f32.mrb[0].mxu0
      %v639 = vadd.f32 0.0, %v638
      %v640 = vpop.f32.mrb[0].mxu0
      %641 = vmatprep.mubr.f32.mxu0 0.0
      %642 = vmatmul.mubr.f32.gmra.mrb[0].mxu0 %v570
      %v643 = vpop.f32.mrb[0].mxu0
      %v644 = vadd.f32 0.0, %v643
      %v645 = vpop.f32.mrb[0].mxu0
      %646 = vdwg.mxu0
      %647 = vxpose.xlu0.b32.start [1/16] %v306, 128
      %648 = vxpose.xlu0.b32.cont [2/16] 0.0, 128
      %649 = vxpose.xlu0.b32.cont [3/16] 0.0, 128
      %650 = vxpose.xlu0.b32.cont [4/16] 0.0, 128
      %651 = vxpose.xlu0.b32.cont [5/16] 0.0, 128
      %652 = vxpose.xlu0.b32.cont [6/16] 0.0, 128
      %653 = vxpose.xlu0.b32.cont [7/16] 0.0, 128
      %654 = vxpose.xlu0.b32.cont [8/16] 0.0, 128
      %655 = vxpose.xlu0.b32.cont [9/16] 0.0, 128
      %656 = vxpose.xlu0.b32.cont [10/16] 0.0, 128
      %657 = vxpose.xlu0.b32.cont [11/16] 0.0, 128
      %658 = vxpose.xlu0.b32.cont [12/16] 0.0, 128
      %659 = vxpose.xlu0.b32.cont [13/16] 0.0, 128
      %660 = vxpose.xlu0.b32.cont [14/16] 0.0, 128
      %661 = vxpose.xlu0.b32.cont [15/16] 0.0, 128
      %662 = vxpose.xlu0.b32.end [16/16] 0.0, 128
      %v663 = vpop.trf.xlu0
      %v664 = vpop.trf.xlu0
      %v665 = vpop.trf.xlu0
      %v666 = vpop.trf.xlu0
      %v667 = vpop.trf.xlu0
      %v668 = vpop.trf.xlu0
      %v669 = vpop.trf.xlu0
      %v670 = vpop.trf.xlu0
      %v671 = vpop.trf.xlu0
      %v672 = vpop.trf.xlu0
      %v673 = vpop.trf.xlu0
      %v674 = vpop.trf.xlu0
      %v675 = vpop.trf.xlu0
      %v676 = vpop.trf.xlu0
      %v677 = vpop.trf.xlu0
      %v678 = vpop.trf.xlu0
      %v680 = vsel %vm339, %v663, 0
      %v683 = vsel %vm339, %v664, 0
      %685 = vmatprep.subr.mxu0 0.0
      %686 = vmatpush1.msra.mxu0 %v298
      %687 = vmatprep.subr.mxu0 0.0
      %688 = vmatpush1.msra.mxu0 0.0
      %689 = vmatprep.subr.mxu0 0.0
      %690 = vmatpush1.msra.mxu0 0.0
      %691 = vmatprep.subr.mxu0 0.0
      %692 = vmatpush1.msra.mxu0 0.0
      %693 = vmatprep.subr.mxu0 0.0
      %694 = vmatpush1.msra.mxu0 0.0
      %695 = vmatprep.subr.mxu0 0.0
      %696 = vmatpush1.msra.mxu0 0.0
      %697 = vmatprep.subr.mxu0 0.0
      %698 = vmatpush1.msra.mxu0 0.0
      %699 = vmatprep.subr.mxu0 0.0
      %700 = vmatpush1.msra.mxu0 0.0
      %701 = vmatprep.subr.mxu0 0.0
      %702 = vmatpush1.msra.mxu0 0.0
      %703 = vmatprep.subr.mxu0 0.0
      %704 = vmatpush1.msra.mxu0 0.0
      %705 = vmatprep.subr.mxu0 0.0
      %706 = vmatpush1.msra.mxu0 0.0
      %707 = vmatprep.subr.mxu0 0.0
      %708 = vmatpush1.msra.mxu0 0.0
      %709 = vmatprep.subr.mxu0 0.0
      %710 = vmatpush1.msra.mxu0 0.0
      %711 = vmatprep.subr.mxu0 0.0
      %712 = vmatpush1.msra.mxu0 0.0
      %713 = vmatprep.subr.mxu0 0.0
      %714 = vmatpush1.msra.mxu0 0.0
      %715 = vmatprep.subr.mxu0 0.0
      %716 = vmatpush1.msra.mxu0 0.0
      %717 = vmatprep.subr.mxu0 0.0
      %718 = vmatpush1.msra.mxu0 0.0
      %719 = vmatprep.subr.mxu0 0.0
      %720 = vmatpush1.msra.mxu0 0.0
      %721 = vmatprep.subr.mxu0 0.0
      %722 = vmatpush1.msra.mxu0 0.0
      %723 = vmatprep.subr.mxu0 0.0
      %724 = vmatpush1.msra.mxu0 0.0
      %725 = vmatprep.subr.mxu0 0.0
      %726 = vmatpush1.msra.mxu0 0.0
      %727 = vmatprep.subr.mxu0 0.0
      %728 = vmatpush1.msra.mxu0 0.0
      %729 = vmatprep.subr.mxu0 0.0
      %730 = vmatpush1.msra.mxu0 0.0
      %731 = vmatprep.subr.mxu0 0.0
      %732 = vmatpush1.msra.mxu0 0.0
      %733 = vmatprep.subr.mxu0 0.0
      %734 = vmatpush1.msra.mxu0 0.0
      %735 = vmatprep.subr.mxu0 0.0
      %736 = vmatpush1.msra.mxu0 0.0
      %737 = vmatprep.subr.mxu0 0.0
      %738 = vmatpush1.msra.mxu0 0.0
      %739 = vmatprep.subr.mxu0 0.0
      %740 = vmatpush1.msra.mxu0 0.0
      %741 = vmatprep.subr.mxu0 0.0
      %742 = vmatpush1.msra.mxu0 0.0
      %743 = vmatprep.subr.mxu0 0.0
      %744 = vmatpush1.msra.mxu0 0.0
      %745 = vmatprep.subr.mxu0 0.0
      %746 = vmatpush1.msra.mxu0 0.0
      %747 = vmatprep.subr.mxu0 0.0
      %748 = vmatpush1.msra.mxu0 0.0
      %749 = vmatprep.mubr.f32.mxu0 0.0
      %750 = vmatmul.mubr.f32.gmra.mrb[0].mxu0 %v680
      %v751 = vpop.f32.mrb[0].mxu0
      %v752 = vadd.f32 0.0, %v751
      %v753 = vpop.f32.mrb[0].mxu0
      %754 = vmatprep.mubr.f32.mxu0 0.0
      %755 = vmatmul.mubr.f32.gmra.mrb[0].mxu0 %v683
      %v756 = vpop.f32.mrb[0].mxu0
      %v757 = vadd.f32 0.0, %v756
      %v758 = vpop.f32.mrb[0].mxu0
      %759 = vdwg.mxu0
      %vm760 = vcmask 130048
      %v761 = vsel %vm760, %v413, -inf
      %762 = vmax.xlane.f32.xlu0 %v761
      %v763 = vpop.xlane.xlu0 %762
      %v764 = vsel %vm760, %v418, -inf
      %765 = vmax.xlane.f32.xlu0 %v764
      %v766 = vpop.xlane.xlu0 %765
      %v767 = vsel %vm760, %v526, -inf
      %768 = vmax.xlane.f32.xlu0 %v767
      %v769 = vpop.xlane.xlu0 %768
      %v770 = vsel %vm760, %v531, -inf
      %771 = vmax.xlane.f32.xlu0 %v770
      %v772 = vpop.xlane.xlu0 %771
      %v773 = vsel %vm760, %v639, -inf
      %774 = vmax.xlane.f32.xlu0 %v773
      %v775 = vpop.xlane.xlu0 %774
      %v776 = vsel %vm760, %v644, -inf
      %777 = vmax.xlane.f32.xlu0 %v776
      %v778 = vpop.xlane.xlu0 %777
      %v779 = vsel %vm760, %v752, -inf
      %780 = vmax.xlane.f32.xlu0 %v779
      %v781 = vpop.xlane.xlu0 %780
      %v782 = vsel %vm760, %v757, -inf
      %783 = vmax.xlane.f32.xlu0 %v782
      %v784 = vpop.xlane.xlu0 %783
      %v785 = vsub.f32 %v413, %v763
      %v786 = vsub.f32 %v418, %v766
      %v787 = vsub.f32 %v526, %v769
      %v788 = vsub.f32 %v531, %v772
      %v789 = vsub.f32 %v639, %v775
      %v790 = vsub.f32 %v644, %v778
      %v791 = vsub.f32 %v752, %v781
      %v792 = vsub.f32 %v757, %v784
      %v793 = vmul.f32 %v785, 1.442695
      %v794 = vpow.pop %v793
      %v795 = vmul.f32 %v786, 1.442695
      %v796 = vpow.pop %v795
      %v797 = vmul.f32 %v787, 1.442695
      %v798 = vpow.pop %v797
      %v799 = vmul.f32 %v788, 1.442695
      %v800 = vpow.pop %v799
      %v801 = vmul.f32 %v789, 1.442695
      %v802 = vpow.pop %v801
      %v803 = vmul.f32 %v790, 1.442695
      %v804 = vpow.pop %v803
      %v805 = vmul.f32 %v791, 1.442695
      %v806 = vpow.pop %v805
      %v807 = vmul.f32 %v792, 1.442695
      %v808 = vpow.pop %v807
      %v809 = vsel %vm760, %v794, 0.0
      %810 = vadd.xlane.f32.xlu0 %v809
      %v811 = vpop.xlane.xlu0 %810
      %v812 = vsel %vm760, %v796, 0.0
      %813 = vadd.xlane.f32.xlu0 %v812
      %v814 = vpop.xlane.xlu0 %813
      %v815 = vsel %vm760, %v798, 0.0
      %816 = vadd.xlane.f32.xlu0 %v815
      %v817 = vpop.xlane.xlu0 %816
      %v818 = vsel %vm760, %v800, 0.0
      %819 = vadd.xlane.f32.xlu0 %v818
      %v820 = vpop.xlane.xlu0 %819
      %v821 = vsel %vm760, %v802, 0.0
      %822 = vadd.xlane.f32.xlu0 %v821
      %v823 = vpop.xlane.xlu0 %822
      %v824 = vsel %vm760, %v804, 0.0
      %825 = vadd.xlane.f32.xlu0 %v824
      %v826 = vpop.xlane.xlu0 %825
      %v827 = vsel %vm760, %v806, 0.0
      %828 = vadd.xlane.f32.xlu0 %v827
      %v829 = vpop.xlane.xlu0 %828
      %v830 = vsel %vm760, %v808, 0.0
      %831 = vadd.xlane.f32.xlu0 %v830
      %v832 = vpop.xlane.xlu0 %831
      %v833 = vrcp.pop %v811
      %v834 = vrcp.pop %v814
      %v835 = vrcp.pop %v817
      %v836 = vrcp.pop %v820
      %v837 = vrcp.pop %v823
      %v838 = vrcp.pop %v826
      %v839 = vrcp.pop %v829
      %v840 = vrcp.pop %v832
      %v841 = vmul.f32 %v794, %v833
      %v842 = vmul.f32 %v796, %v834
      %v843 = vmul.f32 %v798, %v835
      %v844 = vmul.f32 %v800, %v836
      %v845 = vmul.f32 %v802, %v837
      %v846 = vmul.f32 %v804, %v838
      %v847 = vmul.f32 %v806, %v839
      %v848 = vmul.f32 %v808, %v840
      %v850 = vsel %vm760, %v299, 0
      %v853 = vsel %vm760, %v841, 0
      %v856 = vsel %vm760, %v842, 0
      %858 = vmatprep.subr.mxu0 0.0
      %859 = vmatpush1.xpose.msra.mxu0 %v853
      %860 = vmatprep.subr.mxu0 0.0
      %861 = vmatpush1.xpose.msra.mxu0 %v856
      %862 = vmatprep.subr.mxu0 0.0
      %863 = vmatpush1.xpose.msra.mxu0 0.0
      %864 = vmatprep.subr.mxu0 0.0
      %865 = vmatpush1.xpose.msra.mxu0 0.0
      %866 = vmatprep.subr.mxu0 0.0
      %867 = vmatpush1.xpose.msra.mxu0 0.0
      %868 = vmatprep.subr.mxu0 0.0
      %869 = vmatpush1.xpose.msra.mxu0 0.0
      %870 = vmatprep.subr.mxu0 0.0
      %871 = vmatpush1.xpose.msra.mxu0 0.0
      %872 = vmatprep.subr.mxu0 0.0
      %873 = vmatpush1.xpose.msra.mxu0 0.0
      %874 = vmatprep.subr.mxu0 0.0
      %875 = vmatpush1.xpose.msra.mxu0 0.0
      %876 = vmatprep.subr.mxu0 0.0
      %877 = vmatpush1.xpose.msra.mxu0 0.0
      %878 = vmatprep.subr.mxu0 0.0
      %879 = vmatpush1.xpose.msra.mxu0 0.0
      %880 = vmatprep.subr.mxu0 0.0
      %881 = vmatpush1.xpose.msra.mxu0 0.0
      %882 = vmatprep.subr.mxu0 0.0
      %883 = vmatpush1.xpose.msra.mxu0 0.0
      %884 = vmatprep.subr.mxu0 0.0
      %885 = vmatpush1.xpose.msra.mxu0 0.0
      %886 = vmatprep.subr.mxu0 0.0
      %887 = vmatpush1.xpose.msra.mxu0 0.0
      %888 = vmatprep.subr.mxu0 0.0
      %889 = vmatpush1.xpose.msra.mxu0 0.0
      %890 = vmatprep.subr.mxu0 0.0
      %891 = vmatpush1.xpose.msra.mxu0 0.0
      %892 = vmatprep.subr.mxu0 0.0
      %893 = vmatpush1.xpose.msra.mxu0 0.0
      %894 = vmatprep.subr.mxu0 0.0
      %895 = vmatpush1.xpose.msra.mxu0 0.0
      %896 = vmatprep.subr.mxu0 0.0
      %897 = vmatpush1.xpose.msra.mxu0 0.0
      %898 = vmatprep.subr.mxu0 0.0
      %899 = vmatpush1.xpose.msra.mxu0 0.0
      %900 = vmatprep.subr.mxu0 0.0
      %901 = vmatpush1.xpose.msra.mxu0 0.0
      %902 = vmatprep.subr.mxu0 0.0
      %903 = vmatpush1.xpose.msra.mxu0 0.0
      %904 = vmatprep.subr.mxu0 0.0
      %905 = vmatpush1.xpose.msra.mxu0 0.0
      %906 = vmatprep.subr.mxu0 0.0
      %907 = vmatpush1.xpose.msra.mxu0 0.0
      %908 = vmatprep.subr.mxu0 0.0
      %909 = vmatpush1.xpose.msra.mxu0 0.0
      %910 = vmatprep.subr.mxu0 0.0
      %911 = vmatpush1.xpose.msra.mxu0 0.0
      %912 = vmatprep.subr.mxu0 0.0
      %913 = vmatpush1.xpose.msra.mxu0 0.0
      %914 = vmatprep.subr.mxu0 0.0
      %915 = vmatpush1.xpose.msra.mxu0 0.0
      %916 = vmatprep.subr.mxu0 0.0
      %917 = vmatpush1.xpose.msra.mxu0 0.0
      %918 = vmatprep.subr.mxu0 0.0
      %919 = vmatpush1.xpose.msra.mxu0 0.0
      %920 = vmatprep.subr.mxu0 0.0
      %921 = vmatpush1.xpose.msra.mxu0 0.0
      %922 = vmatprep.mubr.f32.mxu0 0.0
      %923 = vmatmul.mubr.f32.gmra.mrb[0].mxu0 %v850
      %v924 = vpop.f32.mrb[0].mxu0
      %v925 = vadd.f32 0.0, %v924
      %v926 = vpop.f32.mrb[0].mxu0
      %927 = vdwg.mxu0
      %v929 = vsel %vm760, %v300, 0
      %v932 = vsel %vm760, %v843, 0
      %v935 = vsel %vm760, %v844, 0
      %937 = vmatprep.subr.mxu0 0.0
      %938 = vmatpush1.xpose.msra.mxu0 %v932
      %939 = vmatprep.subr.mxu0 0.0
      %940 = vmatpush1.xpose.msra.mxu0 %v935
      %941 = vmatprep.subr.mxu0 0.0
      %942 = vmatpush1.xpose.msra.mxu0 0.0
      %943 = vmatprep.subr.mxu0 0.0
      %944 = vmatpush1.xpose.msra.mxu0 0.0
      %945 = vmatprep.subr.mxu0 0.0
      %946 = vmatpush1.xpose.msra.mxu0 0.0
      %947 = vmatprep.subr.mxu0 0.0
      %948 = vmatpush1.xpose.msra.mxu0 0.0
      %949 = vmatprep.subr.mxu0 0.0
      %950 = vmatpush1.xpose.msra.mxu0 0.0
      %951 = vmatprep.subr.mxu0 0.0
      %952 = vmatpush1.xpose.msra.mxu0 0.0
      %953 = vmatprep.subr.mxu0 0.0
      %954 = vmatpush1.xpose.msra.mxu0 0.0
      %955 = vmatprep.subr.mxu0 0.0
      %956 = vmatpush1.xpose.msra.mxu0 0.0
      %957 = vmatprep.subr.mxu0 0.0
      %958 = vmatpush1.xpose.msra.mxu0 0.0
      %959 = vmatprep.subr.mxu0 0.0
      %960 = vmatpush1.xpose.msra.mxu0 0.0
      %961 = vmatprep.subr.mxu0 0.0
      %962 = vmatpush1.xpose.msra.mxu0 0.0
      %963 = vmatprep.subr.mxu0 0.0
      %964 = vmatpush1.xpose.msra.mxu0 0.0
      %965 = vmatprep.subr.mxu0 0.0
      %966 = vmatpush1.xpose.msra.mxu0 0.0
      %967 = vmatprep.subr.mxu0 0.0
      %968 = vmatpush1.xpose.msra.mxu0 0.0
      %969 = vmatprep.subr.mxu0 0.0
      %970 = vmatpush1.xpose.msra.mxu0 0.0
      %971 = vmatprep.subr.mxu0 0.0
      %972 = vmatpush1.xpose.msra.mxu0 0.0
      %973 = vmatprep.subr.mxu0 0.0
      %974 = vmatpush1.xpose.msra.mxu0 0.0
      %975 = vmatprep.subr.mxu0 0.0
      %976 = vmatpush1.xpose.msra.mxu0 0.0
      %977 = vmatprep.subr.mxu0 0.0
      %978 = vmatpush1.xpose.msra.mxu0 0.0
      %979 = vmatprep.subr.mxu0 0.0
      %980 = vmatpush1.xpose.msra.mxu0 0.0
      %981 = vmatprep.subr.mxu0 0.0
      %982 = vmatpush1.xpose.msra.mxu0 0.0
      %983 = vmatprep.subr.mxu0 0.0
      %984 = vmatpush1.xpose.msra.mxu0 0.0
      %985 = vmatprep.subr.mxu0 0.0
      %986 = vmatpush1.xpose.msra.mxu0 0.0
      %987 = vmatprep.subr.mxu0 0.0
      %988 = vmatpush1.xpose.msra.mxu0 0.0
      %989 = vmatprep.subr.mxu0 0.0
      %990 = vmatpush1.xpose.msra.mxu0 0.0
      %991 = vmatprep.subr.mxu0 0.0
      %992 = vmatpush1.xpose.msra.mxu0 0.0
      %993 = vmatprep.subr.mxu0 0.0
      %994 = vmatpush1.xpose.msra.mxu0 0.0
      %995 = vmatprep.subr.mxu0 0.0
      %996 = vmatpush1.xpose.msra.mxu0 0.0
      %997 = vmatprep.subr.mxu0 0.0
      %998 = vmatpush1.xpose.msra.mxu0 0.0
      %999 = vmatprep.subr.mxu0 0.0
      %1000 = vmatpush1.xpose.msra.mxu0 0.0
      %1001 = vmatprep.mubr.f32.mxu0 0.0
      %1002 = vmatmul.mubr.f32.gmra.mrb[0].mxu0 %v929
      %v1003 = vpop.f32.mrb[0].mxu0
      %v1004 = vadd.f32 0.0, %v1003
      %v1005 = vpop.f32.mrb[0].mxu0
      %1006 = vdwg.mxu0
      %v1008 = vsel %vm760, %v301, 0
      %v1011 = vsel %vm760, %v845, 0
      %v1014 = vsel %vm760, %v846, 0
      %1016 = vmatprep.subr.mxu0 0.0
      %1017 = vmatpush1.xpose.msra.mxu0 %v1011
      %1018 = vmatprep.subr.mxu0 0.0
      %1019 = vmatpush1.xpose.msra.mxu0 %v1014
      %1020 = vmatprep.subr.mxu0 0.0
      %1021 = vmatpush1.xpose.msra.mxu0 0.0
      %1022 = vmatprep.subr.mxu0 0.0
      %1023 = vmatpush1.xpose.msra.mxu0 0.0
      %1024 = vmatprep.subr.mxu0 0.0
      %1025 = vmatpush1.xpose.msra.mxu0 0.0
      %1026 = vmatprep.subr.mxu0 0.0
      %1027 = vmatpush1.xpose.msra.mxu0 0.0
      %1028 = vmatprep.subr.mxu0 0.0
      %1029 = vmatpush1.xpose.msra.mxu0 0.0
      %1030 = vmatprep.subr.mxu0 0.0
      %1031 = vmatpush1.xpose.msra.mxu0 0.0
      %1032 = vmatprep.subr.mxu0 0.0
      %1033 = vmatpush1.xpose.msra.mxu0 0.0
      %1034 = vmatprep.subr.mxu0 0.0
      %1035 = vmatpush1.xpose.msra.mxu0 0.0
      %1036 = vmatprep.subr.mxu0 0.0
      %1037 = vmatpush1.xpose.msra.mxu0 0.0
      %1038 = vmatprep.subr.mxu0 0.0
      %1039 = vmatpush1.xpose.msra.mxu0 0.0
      %1040 = vmatprep.subr.mxu0 0.0
      %1041 = vmatpush1.xpose.msra.mxu0 0.0
      %1042 = vmatprep.subr.mxu0 0.0
      %1043 = vmatpush1.xpose.msra.mxu0 0.0
      %1044 = vmatprep.subr.mxu0 0.0
      %1045 = vmatpush1.xpose.msra.mxu0 0.0
      %1046 = vmatprep.subr.mxu0 0.0
      %1047 = vmatpush1.xpose.msra.mxu0 0.0
      %1048 = vmatprep.subr.mxu0 0.0
      %1049 = vmatpush1.xpose.msra.mxu0 0.0
      %1050 = vmatprep.subr.mxu0 0.0
      %1051 = vmatpush1.xpose.msra.mxu0 0.0
      %1052 = vmatprep.subr.mxu0 0.0
      %1053 = vmatpush1.xpose.msra.mxu0 0.0
      %1054 = vmatprep.subr.mxu0 0.0
      %1055 = vmatpush1.xpose.msra.mxu0 0.0
      %1056 = vmatprep.subr.mxu0 0.0
      %1057 = vmatpush1.xpose.msra.mxu0 0.0
      %1058 = vmatprep.subr.mxu0 0.0
      %1059 = vmatpush1.xpose.msra.mxu0 0.0
      %1060 = vmatprep.subr.mxu0 0.0
      %1061 = vmatpush1.xpose.msra.mxu0 0.0
      %1062 = vmatprep.subr.mxu0 0.0
      %1063 = vmatpush1.xpose.msra.mxu0 0.0
      %1064 = vmatprep.subr.mxu0 0.0
      %1065 = vmatpush1.xpose.msra.mxu0 0.0
      %1066 = vmatprep.subr.mxu0 0.0
      %1067 = vmatpush1.xpose.msra.mxu0 0.0
      %1068 = vmatprep.subr.mxu0 0.0
      %1069 = vmatpush1.xpose.msra.mxu0 0.0
      %1070 = vmatprep.subr.mxu0 0.0
      %1071 = vmatpush1.xpose.msra.mxu0 0.0
      %1072 = vmatprep.subr.mxu0 0.0
      %1073 = vmatpush1.xpose.msra.mxu0 0.0
      %1074 = vmatprep.subr.mxu0 0.0
      %1075 = vmatpush1.xpose.msra.mxu0 0.0
      %1076 = vmatprep.subr.mxu0 0.0
      %1077 = vmatpush1.xpose.msra.mxu0 0.0
      %1078 = vmatprep.subr.mxu0 0.0
      %1079 = vmatpush1.xpose.msra.mxu0 0.0
      %1080 = vmatprep.mubr.f32.mxu0 0.0
      %1081 = vmatmul.mubr.f32.gmra.mrb[0].mxu0 %v1008
      %v1082 = vpop.f32.mrb[0].mxu0
      %v1083 = vadd.f32 0.0, %v1082
      %v1084 = vpop.f32.mrb[0].mxu0
      %1085 = vdwg.mxu0
      %v1087 = vsel %vm760, %v302, 0
      %v1090 = vsel %vm760, %v847, 0
      %v1093 = vsel %vm760, %v848, 0
      %1095 = vmatprep.subr.mxu0 0.0
      %1096 = vmatpush1.xpose.msra.mxu0 %v1090
      %1097 = vmatprep.subr.mxu0 0.0
      %1098 = vmatpush1.xpose.msra.mxu0 %v1093
      %1099 = vmatprep.subr.mxu0 0.0
      %1100 = vmatpush1.xpose.msra.mxu0 0.0
      %1101 = vmatprep.subr.mxu0 0.0
      %1102 = vmatpush1.xpose.msra.mxu0 0.0
      %1103 = vmatprep.subr.mxu0 0.0
      %1104 = vmatpush1.xpose.msra.mxu0 0.0
      %1105 = vmatprep.subr.mxu0 0.0
      %1106 = vmatpush1.xpose.msra.mxu0 0.0
      %1107 = vmatprep.subr.mxu0 0.0
      %1108 = vmatpush1.xpose.msra.mxu0 0.0
      %1109 = vmatprep.subr.mxu0 0.0
      %1110 = vmatpush1.xpose.msra.mxu0 0.0
      %1111 = vmatprep.subr.mxu0 0.0
      %1112 = vmatpush1.xpose.msra.mxu0 0.0
      %1113 = vmatprep.subr.mxu0 0.0
      %1114 = vmatpush1.xpose.msra.mxu0 0.0
      %1115 = vmatprep.subr.mxu0 0.0
      %1116 = vmatpush1.xpose.msra.mxu0 0.0
      %1117 = vmatprep.subr.mxu0 0.0
      %1118 = vmatpush1.xpose.msra.mxu0 0.0
      %1119 = vmatprep.subr.mxu0 0.0
      %1120 = vmatpush1.xpose.msra.mxu0 0.0
      %1121 = vmatprep.subr.mxu0 0.0
      %1122 = vmatpush1.xpose.msra.mxu0 0.0
      %1123 = vmatprep.subr.mxu0 0.0
      %1124 = vmatpush1.xpose.msra.mxu0 0.0
      %1125 = vmatprep.subr.mxu0 0.0
      %1126 = vmatpush1.xpose.msra.mxu0 0.0
      %1127 = vmatprep.subr.mxu0 0.0
      %1128 = vmatpush1.xpose.msra.mxu0 0.0
      %1129 = vmatprep.subr.mxu0 0.0
      %1130 = vmatpush1.xpose.msra.mxu0 0.0
      %1131 = vmatprep.subr.mxu0 0.0
      %1132 = vmatpush1.xpose.msra.mxu0 0.0
      %1133 = vmatprep.subr.mxu0 0.0
      %1134 = vmatpush1.xpose.msra.mxu0 0.0
      %1135 = vmatprep.subr.mxu0 0.0
      %1136 = vmatpush1.xpose.msra.mxu0 0.0
      %1137 = vmatprep.subr.mxu0 0.0
      %1138 = vmatpush1.xpose.msra.mxu0 0.0
      %1139 = vmatprep.subr.mxu0 0.0
      %1140 = vmatpush1.xpose.msra.mxu0 0.0
      %1141 = vmatprep.subr.mxu0 0.0
      %1142 = vmatpush1.xpose.msra.mxu0 0.0
      %1143 = vmatprep.subr.mxu0 0.0
      %1144 = vmatpush1.xpose.msra.mxu0 0.0
      %1145 = vmatprep.subr.mxu0 0.0
      %1146 = vmatpush1.xpose.msra.mxu0 0.0
      %1147 = vmatprep.subr.mxu0 0.0
      %1148 = vmatpush1.xpose.msra.mxu0 0.0
      %1149 = vmatprep.subr.mxu0 0.0
      %1150 = vmatpush1.xpose.msra.mxu0 0.0
      %1151 = vmatprep.subr.mxu0 0.0
      %1152 = vmatpush1.xpose.msra.mxu0 0.0
      %1153 = vmatprep.subr.mxu0 0.0
      %1154 = vmatpush1.xpose.msra.mxu0 0.0
      %1155 = vmatprep.subr.mxu0 0.0
      %1156 = vmatpush1.xpose.msra.mxu0 0.0
      %1157 = vmatprep.subr.mxu0 0.0
      %1158 = vmatpush1.xpose.msra.mxu0 0.0
      %1159 = vmatprep.mubr.f32.mxu0 0.0
      %1160 = vmatmul.mubr.f32.gmra.mrb[0].mxu0 %v1087
      %v1161 = vpop.f32.mrb[0].mxu0
      %v1162 = vadd.f32 0.0, %v1161
      %v1163 = vpop.f32.mrb[0].mxu0
      %1164 = vdwg.mxu0
      %1165 = vst.msk [vmem:[%s288] sm:$0xff] %vm760, %v925
      %1166 = vst.msk [vmem:[%s288 + $0x8] sm:$0xff] %vm760, %v1004
      %1167 = vst.msk [vmem:[%s288 + $0x10] sm:$0xff] %vm760, %v1083
      %1168 = vst.msk [vmem:[%s288 + $0x18] sm:$0xff] %vm760, %v1162
      %s1169 = sadd.s32 %s18, %s19
      %s1170 = smul.u32 4, %s1169
      %p1171 = scmp.lt.s32.totalorder %s1170, 7
      %s1172 = scalar_select %p1171, %s1170, 7
      %s1173 = smul.addr %s1172, 8
      %s1174 = scalar_lea.vmem %s3, %s1173
      // Predicated region
      $region33: #{qkv_attention_pallas.1} parent=31 // pred_check
        %p1175 = pneg %p140
      $region34: #{qkv_attention_pallas.1} parent=31 // pred_check_branch
        %1177 = sbr.rel (%p1175) target = $region36
      $region35: #{qkv_attention_pallas.1} parent=31 // pred_region
        %s1178 = sadd.s32 %s18, %s19
        %s1179 = smul.u32 4, %s1178
      $region36: #{qkv_attention_pallas.1} parent=31 // pred_fallthru
        _
    $region32: #{qkv_attention_pallas.1} parent=5 // pred_fallthru
      _
    %p1180 = scmp.le.s32.totalorder 2, %s9
    // Predicated region
    $region37: #{qkv_attention_pallas.1} parent=5 // pred_check
      %p1181 = pneg %p1180
    $region38: #{qkv_attention_pallas.1} parent=5 // pred_check_branch
      %1183 = sbr.rel (%p1181) target = $region40
    $region39: #{qkv_attention_pallas.1} parent=5 // pred_region
      %s1184 = ssub.s32 %s9, 2
      // Predicated region
      $region41: #{qkv_attention_pallas.1} parent=39 // pred_check
        %p1185 = pneg %p146
      $region42: #{qkv_attention_pallas.1} parent=39 // pred_check_branch
        %1187 = sbr.rel (%p1185) target = $region44
      $region43: #{qkv_attention_pallas.1} parent=39 // pred_region
        %s1188 = sadd.s32 %s20, %s21
        %s1189 = smul.u32 4, %s1188
        %p1190 = scmp.lt.s32.totalorder %s1189, 7
        %s1191 = scalar_select %p1190, %s1189, 7
        %s1192 = smul.addr %s1191, 8
        %s1193 = scalar_lea.vmem %s3, %s1192
      $region44: #{qkv_attention_pallas.1} parent=39 // pred_fallthru
        _
    $region40: #{qkv_attention_pallas.1} parent=5 // pred_fallthru
      _
  $region6: #{qkv_attention_pallas.1} parent=0 // loop_footer
    %s13 = sadd.s32 1, %s9
  $region7: #{qkv_attention_pallas.1} parent=0 // loop_footer_branch
    %8 = sbr.rel target = $region3
  $region8: #{qkv_attention_pallas.1} parent=0 // loop_exit
    _

</llo_original>
